<compile_context>
chip_gen: v7x
topology: tpu7x:2x2x1
jax: 0.10.0
libtpu: 0.0.40
codegen_flags: <defaults>
</compile_context>

<pallas_src>
import math
import numpy as np
import jax
import jax.numpy as jnp
from jax.experimental import pallas as pl
from jax.experimental.pallas import tpu as pltpu


MONTH_SIZE, DAY_SIZE, WEEKDAY_SIZE, HOUR_SIZE = 13, 32, 7, 24  # freq='h'


# ----------------------------------------------------------------------------
# Parameter construction (deterministic, matches FixedEmbedding.__init__)
# ----------------------------------------------------------------------------
def fixed_embedding_table(c_in: int, d_model: int) -> jnp.ndarray:
    w = np.zeros((c_in, d_model), dtype=np.float32)
    position = np.arange(0, c_in, dtype=np.float32)[:, None]
    div_term = np.exp(
        np.arange(0, d_model, 2, dtype=np.float32) * -(math.log(10000.0) / d_model)
    )
    w[:, 0::2] = np.sin(position * div_term)
    w[:, 1::2] = np.cos(position * div_term)
    return jnp.asarray(w)


# ----------------------------------------------------------------------------
# Pallas kernel
# ----------------------------------------------------------------------------
def _make_kernel(pack: int, n_chan: int, vpad: int, inner_rows: int):
    def kernel(x_ref, tbl_ref, o_ref):
        # x_ref  : (TR, pack*n_chan) int32  -- offset-adjusted fused indices
        # tbl_ref: (pack*vpad, pack*d_model) bf16 -- column-shifted stacked tables
        # o_ref  : (TR, pack*d_model) f32   -- lane-dense output slab
        tr = x_ref.shape[0]
        n_inner = tr // inner_rows
        # Hoisted loop invariants (JAX doesn't CSE broadcast_in_dim in loops).
        iota = jax.lax.broadcasted_iota(jnp.int32, (inner_rows, vpad), 1)
        tbl = tbl_ref[...]                               # (pack*vpad, outw) bf16

        @pl.loop(0, n_inner)
        def _(s):
            r0 = pl.multiple_of(s * inner_rows, inner_rows)
            idx_all = x_ref[pl.ds(r0, inner_rows), :]    # (IR, pack*n_chan)
            hots = []
            for j in range(pack):                        # unrolled at trace time
                idx = idx_all[:, j * n_chan:(j + 1) * n_chan]
                hit = iota == idx[:, 0:1]
                for c in range(1, n_chan):
                    hit = hit | (iota == idx[:, c:c + 1])  # channel ranges disjoint
                hots.append(hit.astype(jnp.bfloat16))    # convert once, in MXU dtype
            # Lane-axis concat (no relayout) -> single K = pack*vpad MXU matmul,
            # written straight to the output (no accumulator RMW).
            multi_hot = hots[0] if pack == 1 else jnp.concatenate(hots, axis=1)
            o_ref[pl.ds(r0, inner_rows), :] = jnp.dot(
                multi_hot, tbl, preferred_element_type=jnp.float32
            )
    return kernel


# ----------------------------------------------------------------------------
# Wrapper
# ----------------------------------------------------------------------------
def fused_fixed_embedding(x, tables, *, tile_rows: int = 16384, inner_rows: int = 512):
    """Sum of per-channel FixedEmbedding lookups.

    x       : [B, L, C>=len(tables)] integer; channel c indexes tables[c].
    tables  : list of (vocab_c, d_model) float32 fixed sinusoidal tables.
    returns : [B, L, d_model] float32  (single table == FixedEmbedding.forward)
    """
    B, L, C = x.shape
    n_chan = len(tables)
    assert C >= n_chan
    d_model = int(tables[0].shape[1])
    N = B * L

    # lane-dense packing: how many d_model-wide rows fill the 128-lane vreg
    pack = 128 // d_model if (d_model <= 128 and 128 % d_model == 0) else 1
    outw = pack * d_model

    sizes = [int(t.shape[0]) for t in tables]
    total_vocab = sum(sizes)
    vpad = max(128, ((total_vocab + 127) // 128) * 128)  # MXU-aligned fused vocab
    offsets = np.concatenate([[0], np.cumsum(sizes)[:-1]]).astype(np.int32)

    # Fused, vocab-padded, column-shifted table stack (pack*vpad, outw), bf16.
    fused = np.zeros((vpad, d_model), np.float32)
    fused[:total_vocab] = np.concatenate([np.asarray(t) for t in tables], axis=0)
    stack = np.zeros((pack, vpad, outw), np.float32)
    for j in range(pack):
        stack[j, :, j * d_model:(j + 1) * d_model] = fused
    tbl = jnp.asarray(stack.reshape(pack * vpad, outw), dtype=jnp.bfloat16)

    # Pre-add per-channel vocab offsets outside the kernel (one cheap XLA op).
    x_off = x.reshape(N, C)[:, :n_chan].astype(jnp.int32) + jnp.asarray(offsets)[None, :]

    # ---- tile-size selection -------------------------------------------
    r_needed = pl.cdiv(N, pack)                      # packed rows of real data
    r_ceil8 = ((r_needed + 7) // 8) * 8
    target_r = max(8, (tile_rows // pack) // 8 * 8)  # big-tile target (packed rows)
    tile_r = min(target_r, r_ceil8)                  # small-N: don't overcompute
    if tile_r >= r_ceil8 and r_ceil8 > 8:
        # One tile would cover everything -> split so v7x's 2 TCs both get work.
        tile_r = max(8, ((r_ceil8 // 2 + 7) // 8) * 8)
    if tile_r >= inner_rows:                         # keep tile a multiple of the
        tile_r = pl.cdiv(tile_r, inner_rows) * inner_rows   # in-kernel chunk
        ch = inner_rows
    else:
        ch = tile_r                                  # tiny tiles: one inner chunk

    grid_steps = pl.cdiv(r_needed, tile_r)
    r_pad = grid_steps * tile_r
    n_pad = r_pad * pack
    if n_pad > N:
        # Padded rows index a vocab-padded (zero) row when total_vocab < vpad;
        # if total_vocab were an exact multiple of 128 they'd hit a real row,
        # which is still harmless because padded rows are sliced off below.
        pad_idx = min(total_vocab, vpad - 1)
        x_off = jnp.concatenate(
            [x_off, jnp.full((n_pad - N, n_chan), pad_idx, dtype=jnp.int32)], axis=0
        )
    x2 = x_off.reshape(r_pad, pack * n_chan)

    kernel = _make_kernel(pack, n_chan, vpad, ch)
    out2d = pl.pallas_call(
        kernel,
        out_shape=jax.ShapeDtypeStruct((r_pad, outw), jnp.float32),
        grid=(grid_steps,),
        in_specs=[
            # NOTE: the (tile_r, pack*n_chan) int32 block lane-pads to 128 in
            # VMEM; its padded size is included in the vmem_limit budget below.
            pl.BlockSpec((tile_r, pack * n_chan), lambda i: (i, 0)),
            # Constant table (index_map always (0,0)): single-buffer it.
            pl.BlockSpec((pack * vpad, outw), lambda i: (0, 0),
                         pipeline_mode=pl.Buffered(1)),
        ],
        out_specs=pl.BlockSpec((tile_r, outw), lambda i: (i, 0)),
        compiler_params=pltpu.CompilerParams(
            # 1-D parallel grid -> megacore sharding on v7x.
            dimension_semantics=("parallel",),
            # ~11-12 MiB needed at tile_r=4096 (incl. lane-padded x block and
            # in-kernel chunk temporaries); 32 MiB covers v5e's 16 MiB default
            # and matches the v6e/v7x defaults.
            vmem_limit_bytes=32 * 1024 * 1024,
        ),
    )(x2, tbl)

    # (r_pad, pack*d_model) is row-major bit-identical to (n_pad, d_model).
    return out2d.reshape(n_pad, d_model)[:N].reshape(B, L, d_model)


# ----------------------------------------------------------------------------
# Reference (plain JAX, exact f32 tables) for verification
# ----------------------------------------------------------------------------
def fused_fixed_embedding_ref(x, tables):
    x = x.astype(jnp.int32)
    out = 0.0
    for c, t in enumerate(tables):
        out = out + jnp.take(t, x[..., c], axis=0)
    return out


if __name__ == "__main__":
    B, L, d_model = 2, 8, 32

    month_w = fixed_embedding_table(MONTH_SIZE, d_model)
    day_w = fixed_embedding_table(DAY_SIZE, d_model)
    wday_w = fixed_embedding_table(WEEKDAY_SIZE, d_model)
    hour_w = fixed_embedding_table(HOUR_SIZE, d_model)
    tables = [month_w, day_w, wday_w, hour_w]   # x channels: month,day,weekday,hour

    key = jax.random.PRNGKey(0)
    k0, k1, k2, k3 = jax.random.split(key, 4)
    month = jax.random.randint(k0, (B, L, 1), 0, MONTH_SIZE, dtype=jnp.int32)
    day = jax.random.randint(k1, (B, L, 1), 0, DAY_SIZE, dtype=jnp.int32)
    weekday = jax.random.randint(k2, (B, L, 1), 0, WEEKDAY_SIZE, dtype=jnp.int32)
    hour = jax.random.randint(k3, (B, L, 1), 0, HOUR_SIZE, dtype=jnp.int32)
    x = jnp.concatenate([month, day, weekday, hour], axis=-1)   # [B, L, 4]

    # Tolerance relaxed vs the f32 version: the table is stored in bf16 for the
    # MXU (multi-hot 0/1 is exact), so each of the <=4 summed entries carries
    # ~1e-3 absolute rounding error.
    TOL = 2e-2

    # 4-channel temporal configuration (TemporalEmbedding 'fixed', freq='h')
    out = jax.block_until_ready(fused_fixed_embedding(x, tables))
    ref = fused_fixed_embedding_ref(x, tables)
    np.testing.assert_allclose(np.asarray(out), np.asarray(ref), atol=TOL, rtol=TOL)

    # Single-table case == the literal FixedEmbedding.forward (one lookup)
    fe = jax.block_until_ready(fused_fixed_embedding(hour[..., :1], [hour_w]))
    fe_ref = jnp.take(hour_w, hour[..., 0], axis=0)
    np.testing.assert_allclose(np.asarray(fe), np.asarray(fe_ref), atol=TOL, rtol=TOL)

    print("KERNEL_OK")
</pallas_src>

<mosaic_0001>
module attributes {stable_mosaic.version = 11 : i64} {
  func.func @kernel(%arg0: i32, %arg1: memref<8x16xi32, #tpu.memory_space<vmem>>, %arg2: memref<512x128xbf16, #tpu.memory_space<vmem>>, %arg3: memref<8x128xf32, #tpu.memory_space<vmem>>) attributes {dimension_semantics = [#tpu.dimension_semantics<parallel>], iteration_bounds = array<i64: 1>, scalar_prefetch = 0 : i64, scratch_operands = 0 : i64, tpu.core_type = #tpu.core_type<tc>, window_params = [{transform_indices = @transform_0, window_bounds = array<i64: 8, 16>}, {pipeline_mode = #tpu.pipeline_mode<synchronous>, transform_indices = @transform_1, window_bounds = array<i64: 512, 128>}, {transform_indices = @transform_2, window_bounds = array<i64: 8, 128>}]} {
    %0 = tpu.iota {dimensions = array<i32: 1>} : vector<8x128xi32>
    %c0 = arith.constant 0 : index
    %c0_0 = arith.constant 0 : index
    %1 = vector.load %arg2[%c0, %c0_0] : memref<512x128xbf16, #tpu.memory_space<vmem>>, vector<512x128xbf16>
    %c0_i32 = arith.constant 0 : i32
    %c1_i32 = arith.constant 1 : i32
    %2 = arith.muli %c0_i32, %c1_i32 : i32
    %c0_i32_1 = arith.constant 0 : i32
    %3 = arith.addi %c0_i32_1, %2 : i32
    %c8_i32 = arith.constant 8 : i32
    %4 = arith.muli %3, %c8_i32 : i32
    %5 = tpu.assume_multiple %4, 8 : i32
    %6 = arith.index_cast %5 : i32 to index
    %c0_2 = arith.constant 0 : index
    %7 = vector.load %arg1[%6, %c0_2] : memref<8x16xi32, #tpu.memory_space<vmem>>, vector<8x16xi32>
    %8 = vector.extract_strided_slice %7 {offsets = [0, 0], sizes = [8, 4], strides = [1, 1]} : vector<8x16xi32> to vector<8x4xi32>
    %9 = vector.extract_strided_slice %8 {offsets = [0, 0], sizes = [8, 1], strides = [1, 1]} : vector<8x4xi32> to vector<8x1xi32>
    %10 = vector.broadcast %9 : vector<8x1xi32> to vector<8x128xi32>
    %11 = arith.cmpi eq, %0, %10 : vector<8x128xi32>
    %12 = vector.extract_strided_slice %8 {offsets = [0, 1], sizes = [8, 1], strides = [1, 1]} : vector<8x4xi32> to vector<8x1xi32>
    %13 = vector.broadcast %12 : vector<8x1xi32> to vector<8x128xi32>
    %14 = arith.cmpi eq, %0, %13 : vector<8x128xi32>
    %15 = arith.ori %11, %14 : vector<8x128xi1>
    %16 = vector.extract_strided_slice %8 {offsets = [0, 2], sizes = [8, 1], strides = [1, 1]} : vector<8x4xi32> to vector<8x1xi32>
    %17 = vector.broadcast %16 : vector<8x1xi32> to vector<8x128xi32>
    %18 = arith.cmpi eq, %0, %17 : vector<8x128xi32>
    %19 = arith.ori %15, %18 : vector<8x128xi1>
    %20 = vector.extract_strided_slice %8 {offsets = [0, 3], sizes = [8, 1], strides = [1, 1]} : vector<8x4xi32> to vector<8x1xi32>
    %21 = vector.broadcast %20 : vector<8x1xi32> to vector<8x128xi32>
    %22 = arith.cmpi eq, %0, %21 : vector<8x128xi32>
    %23 = arith.ori %19, %22 : vector<8x128xi1>
    %24 = arith.extui %23 : vector<8x128xi1> to vector<8x128xi32>
    %25 = arith.sitofp %24 : vector<8x128xi32> to vector<8x128xf32>
    %26 = arith.truncf %25 : vector<8x128xf32> to vector<8x128xbf16>
    %27 = vector.extract_strided_slice %7 {offsets = [0, 4], sizes = [8, 4], strides = [1, 1]} : vector<8x16xi32> to vector<8x4xi32>
    %28 = vector.extract_strided_slice %27 {offsets = [0, 0], sizes = [8, 1], strides = [1, 1]} : vector<8x4xi32> to vector<8x1xi32>
    %29 = vector.broadcast %28 : vector<8x1xi32> to vector<8x128xi32>
    %30 = arith.cmpi eq, %0, %29 : vector<8x128xi32>
    %31 = vector.extract_strided_slice %27 {offsets = [0, 1], sizes = [8, 1], strides = [1, 1]} : vector<8x4xi32> to vector<8x1xi32>
    %32 = vector.broadcast %31 : vector<8x1xi32> to vector<8x128xi32>
    %33 = arith.cmpi eq, %0, %32 : vector<8x128xi32>
    %34 = arith.ori %30, %33 : vector<8x128xi1>
    %35 = vector.extract_strided_slice %27 {offsets = [0, 2], sizes = [8, 1], strides = [1, 1]} : vector<8x4xi32> to vector<8x1xi32>
    %36 = vector.broadcast %35 : vector<8x1xi32> to vector<8x128xi32>
    %37 = arith.cmpi eq, %0, %36 : vector<8x128xi32>
    %38 = arith.ori %34, %37 : vector<8x128xi1>
    %39 = vector.extract_strided_slice %27 {offsets = [0, 3], sizes = [8, 1], strides = [1, 1]} : vector<8x4xi32> to vector<8x1xi32>
    %40 = vector.broadcast %39 : vector<8x1xi32> to vector<8x128xi32>
    %41 = arith.cmpi eq, %0, %40 : vector<8x128xi32>
    %42 = arith.ori %38, %41 : vector<8x128xi1>
    %43 = arith.extui %42 : vector<8x128xi1> to vector<8x128xi32>
    %44 = arith.sitofp %43 : vector<8x128xi32> to vector<8x128xf32>
    %45 = arith.truncf %44 : vector<8x128xf32> to vector<8x128xbf16>
    %46 = vector.extract_strided_slice %7 {offsets = [0, 8], sizes = [8, 4], strides = [1, 1]} : vector<8x16xi32> to vector<8x4xi32>
    %47 = vector.extract_strided_slice %46 {offsets = [0, 0], sizes = [8, 1], strides = [1, 1]} : vector<8x4xi32> to vector<8x1xi32>
    %48 = vector.broadcast %47 : vector<8x1xi32> to vector<8x128xi32>
    %49 = arith.cmpi eq, %0, %48 : vector<8x128xi32>
    %50 = vector.extract_strided_slice %46 {offsets = [0, 1], sizes = [8, 1], strides = [1, 1]} : vector<8x4xi32> to vector<8x1xi32>
    %51 = vector.broadcast %50 : vector<8x1xi32> to vector<8x128xi32>
    %52 = arith.cmpi eq, %0, %51 : vector<8x128xi32>
    %53 = arith.ori %49, %52 : vector<8x128xi1>
    %54 = vector.extract_strided_slice %46 {offsets = [0, 2], sizes = [8, 1], strides = [1, 1]} : vector<8x4xi32> to vector<8x1xi32>
    %55 = vector.broadcast %54 : vector<8x1xi32> to vector<8x128xi32>
    %56 = arith.cmpi eq, %0, %55 : vector<8x128xi32>
    %57 = arith.ori %53, %56 : vector<8x128xi1>
    %58 = vector.extract_strided_slice %46 {offsets = [0, 3], sizes = [8, 1], strides = [1, 1]} : vector<8x4xi32> to vector<8x1xi32>
    %59 = vector.broadcast %58 : vector<8x1xi32> to vector<8x128xi32>
    %60 = arith.cmpi eq, %0, %59 : vector<8x128xi32>
    %61 = arith.ori %57, %60 : vector<8x128xi1>
    %62 = arith.extui %61 : vector<8x128xi1> to vector<8x128xi32>
    %63 = arith.sitofp %62 : vector<8x128xi32> to vector<8x128xf32>
    %64 = arith.truncf %63 : vector<8x128xf32> to vector<8x128xbf16>
    %65 = vector.extract_strided_slice %7 {offsets = [0, 12], sizes = [8, 4], strides = [1, 1]} : vector<8x16xi32> to vector<8x4xi32>
    %66 = vector.extract_strided_slice %65 {offsets = [0, 0], sizes = [8, 1], strides = [1, 1]} : vector<8x4xi32> to vector<8x1xi32>
    %67 = vector.broadcast %66 : vector<8x1xi32> to vector<8x128xi32>
    %68 = arith.cmpi eq, %0, %67 : vector<8x128xi32>
    %69 = vector.extract_strided_slice %65 {offsets = [0, 1], sizes = [8, 1], strides = [1, 1]} : vector<8x4xi32> to vector<8x1xi32>
    %70 = vector.broadcast %69 : vector<8x1xi32> to vector<8x128xi32>
    %71 = arith.cmpi eq, %0, %70 : vector<8x128xi32>
    %72 = arith.ori %68, %71 : vector<8x128xi1>
    %73 = vector.extract_strided_slice %65 {offsets = [0, 2], sizes = [8, 1], strides = [1, 1]} : vector<8x4xi32> to vector<8x1xi32>
    %74 = vector.broadcast %73 : vector<8x1xi32> to vector<8x128xi32>
    %75 = arith.cmpi eq, %0, %74 : vector<8x128xi32>
    %76 = arith.ori %72, %75 : vector<8x128xi1>
    %77 = vector.extract_strided_slice %65 {offsets = [0, 3], sizes = [8, 1], strides = [1, 1]} : vector<8x4xi32> to vector<8x1xi32>
    %78 = vector.broadcast %77 : vector<8x1xi32> to vector<8x128xi32>
    %79 = arith.cmpi eq, %0, %78 : vector<8x128xi32>
    %80 = arith.ori %76, %79 : vector<8x128xi1>
    %81 = arith.extui %80 : vector<8x128xi1> to vector<8x128xi32>
    %82 = arith.sitofp %81 : vector<8x128xi32> to vector<8x128xf32>
    %83 = arith.truncf %82 : vector<8x128xf32> to vector<8x128xbf16>
    %84 = tpu.concatenate %26, %45, %64, %83 in 1 : vector<8x128xbf16>, vector<8x128xbf16>, vector<8x128xbf16>, vector<8x128xbf16> -> vector<8x512xbf16>
    %cst = arith.constant dense<0.000000e+00> : vector<8x128xf32>
    %85 = tpu.matmul %84, %1, %cst {dimension_numbers = #tpu.dot_dimension_numbers<[1], [0], [0], [1], [0, 0, 1, 1], [], []>} : vector<8x512xbf16>, vector<512x128xbf16>, vector<8x128xf32> -> vector<8x128xf32>
    %86 = arith.index_cast %5 : i32 to index
    %c0_3 = arith.constant 0 : index
    %87 = vector.load %arg3[%86, %c0_3] : memref<8x128xf32, #tpu.memory_space<vmem>>, vector<8x128xf32>
    tpu.vector_store %arg3[%86, %c0_3], %85 {strides = array<i32>} : memref<8x128xf32, #tpu.memory_space<vmem>>, vector<8x128xf32>,
    %c1_i32_4 = arith.constant 1 : i32
    return
  }
  func.func @transform_0(%arg0: i32) -> (i32, i32) {
    %c0_i32 = arith.constant 0 : i32
    %c0_i32_0 = arith.constant 0 : i32
    return %arg0, %c0_i32 : i32, i32
  }
  func.func @transform_1(%arg0: i32) -> (i32, i32) {
    %c0_i32 = arith.constant 0 : i32
    %c0_i32_0 = arith.constant 0 : i32
    %c0_i32_1 = arith.constant 0 : i32
    return %c0_i32, %c0_i32_0 : i32, i32
  }
  func.func @transform_2(%arg0: i32) -> (i32, i32) {
    %c0_i32 = arith.constant 0 : i32
    %c0_i32_0 = arith.constant 0 : i32
    return %arg0, %c0_i32 : i32, i32
  }
}

</mosaic_0001>

<llo_original>
// kernel: tpu_custom_call.1
$region0: #{tpu_custom_call.1}
  #allocation0 [shape = 'u32[]', space=smem, size = 0x4, offset = 0x4, fixed_abs, tag = 'smem constant byte address 0x4 - core index']
  #allocation1 [shape = 'u32[144,128]{1,0:T(1,128)}', space=vmem, size = 0x12000, scoped, tag = 'internal scratch']
  %s0 = inlined_call_operand.hbm [shape: s32[8,16], index: 0, kind: input, shape index: {}]
  %s1 = inlined_call_operand.hbm [shape: bf16[512,128], index: 1, kind: input, shape index: {}]
  %s2 = inlined_call_operand.hbm [shape: f32[8,128], index: 2, kind: output, shape index: {}]
  %s3 = sld [smem:[#allocation0]]
  $region26: #{tpu_custom_call.1} parent=0
    _
  %s5 = ssub.s32 1, %s3
  %s6 = scalar_select 0, %s5, %s3
  $region1: #{tpu_custom_call.1} parent=0
    #allocation2 [shape = 'u8[4096]{0}', space=vmem, size = 0x1000, scoped, tag = 'input window, operand 0, single buffered']
    #allocation3 [shape = 's32[1]{0}', space=sflag, size = 0x4, scoped, tag = 'scoped memory for tpu_custom_call.1']
    #allocation4 [shape = 's32[1]{0}', space=sflag, size = 0x4, scoped, tag = 'scoped memory for tpu_custom_call.1']
    #allocation5 [shape = 'u8[131072]{0}', space=vmem, size = 0x20000, scoped, tag = 'input window, operand 1, single buffered']
    #allocation6 [shape = 's32[1]{0}', space=sflag, size = 0x4, scoped, tag = 'scoped memory for tpu_custom_call.1']
    #allocation7 [shape = 'u8[4096]{0}', space=vmem, size = 0x1000, scoped, tag = 'output window, operand 0, single buffered']
    %7 = vsyncpa [#allocation3], 0
    %8 = vsyncpa [#allocation6], 0
    %9 = vsyncpa [#allocation4], 0
    // Predicated region
    $region2: #{tpu_custom_call.1} parent=1 // pred_check
      _
    $region3: #{tpu_custom_call.1} parent=1 // pred_check_branch
      %11 = sbr.rel (0) target = $region5
    $region4: #{tpu_custom_call.1} parent=1 // pred_region
      %s13 = ssub.s32 128, 128
      %14 = vsyncadd [#allocation3], %s13
      %s16 = sshll.u32 [#allocation2], 4
      %s17 = int_to_ptr.vmem [resolvable:$true] %s16
      %19 = dma.hbm_to_vmem [thread:$0]  %s0, 128, %s17, [#allocation3]
    $region5: #{tpu_custom_call.1} parent=1 // pred_fallthru
      _
    // Predicated region
    $region6: #{tpu_custom_call.1} parent=1 // pred_check
      _
    $region7: #{tpu_custom_call.1} parent=1 // pred_check_branch
      %21 = sbr.rel (0) target = $region9
    $region8: #{tpu_custom_call.1} parent=1 // pred_region
      %s23 = ssub.s32 4096, 4096
      %24 = vsyncadd [#allocation6], %s23
      %s25 = sshll.u32 [#allocation5], 4
      %s26 = int_to_ptr.vmem [resolvable:$true] %s25
      %31 = dma.hbm_to_vmem [thread:$0]  %s1, 4096, %s26, [#allocation6], 64, 64, 4
    $region9: #{tpu_custom_call.1} parent=1 // pred_fallthru
      _
    // Predicated region
    $region10: #{tpu_custom_call.1} parent=1 // pred_check
      _
    $region11: #{tpu_custom_call.1} parent=1 // pred_check_branch
      %33 = sbr.rel (0) target = $region13
    $region12: #{tpu_custom_call.1} parent=1 // pred_region
      %34 = dma.done [#allocation3], 128
    $region13: #{tpu_custom_call.1} parent=1 // pred_fallthru
      _
    // Predicated region
    $region14: #{tpu_custom_call.1} parent=1 // pred_check
      _
    $region15: #{tpu_custom_call.1} parent=1 // pred_check_branch
      %36 = sbr.rel (0) target = $region17
    $region16: #{tpu_custom_call.1} parent=1 // pred_region
      %37 = dma.done [#allocation6], 4096
    $region17: #{tpu_custom_call.1} parent=1 // pred_fallthru
      _
    %v39 = vlaneseq
    %v40 = vand.u32 %v39, 127
    %v41 = vld [vmem:[#allocation5] sm:$0xf]
    %v42 = vld [vmem:[#allocation5 + $0x4] sm:$0xf]
    %v43 = vld [vmem:[#allocation5 + $0x8] sm:$0xf]
    %v44 = vld [vmem:[#allocation5 + $0xc] sm:$0xf]
    %v45 = vld [vmem:[#allocation5 + $0x10] sm:$0xf]
    %v46 = vld [vmem:[#allocation5 + $0x14] sm:$0xf]
    %v47 = vld [vmem:[#allocation5 + $0x18] sm:$0xf]
    %v48 = vld [vmem:[#allocation5 + $0x1c] sm:$0xf]
    %v49 = vld [vmem:[#allocation5 + $0x20] sm:$0xf]
    %v50 = vld [vmem:[#allocation5 + $0x24] sm:$0xf]
    %v51 = vld [vmem:[#allocation5 + $0x28] sm:$0xf]
    %v52 = vld [vmem:[#allocation5 + $0x2c] sm:$0xf]
    %v53 = vld [vmem:[#allocation5 + $0x30] sm:$0xf]
    %v54 = vld [vmem:[#allocation5 + $0x34] sm:$0xf]
    %v55 = vld [vmem:[#allocation5 + $0x38] sm:$0xf]
    %v56 = vld [vmem:[#allocation5 + $0x3c] sm:$0xf]
    %v57 = vld [vmem:[#allocation5 + $0x40] sm:$0xf]
    %v58 = vld [vmem:[#allocation5 + $0x44] sm:$0xf]
    %v59 = vld [vmem:[#allocation5 + $0x48] sm:$0xf]
    %v60 = vld [vmem:[#allocation5 + $0x4c] sm:$0xf]
    %v61 = vld [vmem:[#allocation5 + $0x50] sm:$0xf]
    %v62 = vld [vmem:[#allocation5 + $0x54] sm:$0xf]
    %v63 = vld [vmem:[#allocation5 + $0x58] sm:$0xf]
    %v64 = vld [vmem:[#allocation5 + $0x5c] sm:$0xf]
    %v65 = vld [vmem:[#allocation5 + $0x60] sm:$0xf]
    %v66 = vld [vmem:[#allocation5 + $0x64] sm:$0xf]
    %v67 = vld [vmem:[#allocation5 + $0x68] sm:$0xf]
    %v68 = vld [vmem:[#allocation5 + $0x6c] sm:$0xf]
    %v69 = vld [vmem:[#allocation5 + $0x70] sm:$0xf]
    %v70 = vld [vmem:[#allocation5 + $0x74] sm:$0xf]
    %v71 = vld [vmem:[#allocation5 + $0x78] sm:$0xf]
    %v72 = vld [vmem:[#allocation5 + $0x7c] sm:$0xf]
    %v73 = vld [vmem:[#allocation5 + $0x80] sm:$0xf]
    %v74 = vld [vmem:[#allocation5 + $0x84] sm:$0xf]
    %v75 = vld [vmem:[#allocation5 + $0x88] sm:$0xf]
    %v76 = vld [vmem:[#allocation5 + $0x8c] sm:$0xf]
    %v77 = vld [vmem:[#allocation5 + $0x90] sm:$0xf]
    %v78 = vld [vmem:[#allocation5 + $0x94] sm:$0xf]
    %v79 = vld [vmem:[#allocation5 + $0x98] sm:$0xf]
    %v80 = vld [vmem:[#allocation5 + $0x9c] sm:$0xf]
    %v81 = vld [vmem:[#allocation5 + $0xa0] sm:$0xf]
    %v82 = vld [vmem:[#allocation5 + $0xa4] sm:$0xf]
    %v83 = vld [vmem:[#allocation5 + $0xa8] sm:$0xf]
    %v84 = vld [vmem:[#allocation5 + $0xac] sm:$0xf]
    %v85 = vld [vmem:[#allocation5 + $0xb0] sm:$0xf]
    %v86 = vld [vmem:[#allocation5 + $0xb4] sm:$0xf]
    %v87 = vld [vmem:[#allocation5 + $0xb8] sm:$0xf]
    %v88 = vld [vmem:[#allocation5 + $0xbc] sm:$0xf]
    %v89 = vld [vmem:[#allocation5 + $0xc0] sm:$0xf]
    %v90 = vld [vmem:[#allocation5 + $0xc4] sm:$0xf]
    %v91 = vld [vmem:[#allocation5 + $0xc8] sm:$0xf]
    %v92 = vld [vmem:[#allocation5 + $0xcc] sm:$0xf]
    %v93 = vld [vmem:[#allocation5 + $0xd0] sm:$0xf]
    %v94 = vld [vmem:[#allocation5 + $0xd4] sm:$0xf]
    %v95 = vld [vmem:[#allocation5 + $0xd8] sm:$0xf]
    %v96 = vld [vmem:[#allocation5 + $0xdc] sm:$0xf]
    %v97 = vld [vmem:[#allocation5 + $0xe0] sm:$0xf]
    %v98 = vld [vmem:[#allocation5 + $0xe4] sm:$0xf]
    %v99 = vld [vmem:[#allocation5 + $0xe8] sm:$0xf]
    %v100 = vld [vmem:[#allocation5 + $0xec] sm:$0xf]
    %v101 = vld [vmem:[#allocation5 + $0xf0] sm:$0xf]
    %v102 = vld [vmem:[#allocation5 + $0xf4] sm:$0xf]
    %v103 = vld [vmem:[#allocation5 + $0xf8] sm:$0xf]
    %v104 = vld [vmem:[#allocation5 + $0xfc] sm:$0xf]
    %v105 = vld [vmem:[#allocation2] sm:$0xff]
    %106 = vset.pattern.permute.xlu0 0
    %107 = vperm.xlu0 %106, %v105
    %v108 = vpop.permute.xlu0 %107
    %vm109 = vcmp.eq.s32.totalorder %v40, %v108
    %110 = vset.pattern.permute.xlu0 1
    %111 = vperm.xlu0 %110, %v105
    %v112 = vpop.permute.xlu0 %111
    %vm113 = vcmp.eq.s32.totalorder %v40, %v112
    %vm114 = vmor %vm109, %vm113
    %115 = vset.pattern.permute.xlu0 2
    %116 = vperm.xlu0 %115, %v105
    %v117 = vpop.permute.xlu0 %116
    %vm118 = vcmp.eq.s32.totalorder %v40, %v117
    %vm119 = vmor %vm114, %vm118
    %120 = vset.pattern.permute.xlu0 3
    %121 = vperm.xlu0 %120, %v105
    %v122 = vpop.permute.xlu0 %121
    %vm123 = vcmp.eq.s32.totalorder %v40, %v122
    %vm124 = vmor %vm119, %vm123
    %v125 = vsel %vm124, 1, 0
    %v126 = vcvt.s32.f32 %v125
    %v127 = vpack.c.bf16 %v126, %v126
    %128 = vset.pattern.permute.xlu0 4
    %129 = vperm.xlu0 %128, %v105
    %v130 = vpop.permute.xlu0 %129
    %vm131 = vcmp.eq.s32.totalorder %v40, %v130
    %132 = vset.pattern.permute.xlu0 5
    %133 = vperm.xlu0 %132, %v105
    %v134 = vpop.permute.xlu0 %133
    %vm135 = vcmp.eq.s32.totalorder %v40, %v134
    %vm136 = vmor %vm131, %vm135
    %137 = vset.pattern.permute.xlu0 6
    %138 = vperm.xlu0 %137, %v105
    %v139 = vpop.permute.xlu0 %138
    %vm140 = vcmp.eq.s32.totalorder %v40, %v139
    %vm141 = vmor %vm136, %vm140
    %142 = vset.pattern.permute.xlu0 7
    %143 = vperm.xlu0 %142, %v105
    %v144 = vpop.permute.xlu0 %143
    %vm145 = vcmp.eq.s32.totalorder %v40, %v144
    %vm146 = vmor %vm141, %vm145
    %v147 = vsel %vm146, 1, 0
    %v148 = vcvt.s32.f32 %v147
    %v149 = vpack.c.bf16 %v148, %v148
    %150 = vset.pattern.permute.xlu0 8
    %151 = vperm.xlu0 %150, %v105
    %v152 = vpop.permute.xlu0 %151
    %vm153 = vcmp.eq.s32.totalorder %v40, %v152
    %154 = vset.pattern.permute.xlu0 9
    %155 = vperm.xlu0 %154, %v105
    %v156 = vpop.permute.xlu0 %155
    %vm157 = vcmp.eq.s32.totalorder %v40, %v156
    %vm158 = vmor %vm153, %vm157
    %159 = vset.pattern.permute.xlu0 10
    %160 = vperm.xlu0 %159, %v105
    %v161 = vpop.permute.xlu0 %160
    %vm162 = vcmp.eq.s32.totalorder %v40, %v161
    %vm163 = vmor %vm158, %vm162
    %164 = vset.pattern.permute.xlu0 11
    %165 = vperm.xlu0 %164, %v105
    %v166 = vpop.permute.xlu0 %165
    %vm167 = vcmp.eq.s32.totalorder %v40, %v166
    %vm168 = vmor %vm163, %vm167
    %v169 = vsel %vm168, 1, 0
    %v170 = vcvt.s32.f32 %v169
    %v171 = vpack.c.bf16 %v170, %v170
    %172 = vset.pattern.permute.xlu0 12
    %173 = vperm.xlu0 %172, %v105
    %v174 = vpop.permute.xlu0 %173
    %vm175 = vcmp.eq.s32.totalorder %v40, %v174
    %176 = vset.pattern.permute.xlu0 13
    %177 = vperm.xlu0 %176, %v105
    %v178 = vpop.permute.xlu0 %177
    %vm179 = vcmp.eq.s32.totalorder %v40, %v178
    %vm180 = vmor %vm175, %vm179
    %181 = vset.pattern.permute.xlu0 14
    %182 = vperm.xlu0 %181, %v105
    %v183 = vpop.permute.xlu0 %182
    %vm184 = vcmp.eq.s32.totalorder %v40, %v183
    %vm185 = vmor %vm180, %vm184
    %186 = vset.pattern.permute.xlu0 15
    %187 = vperm.xlu0 %186, %v105
    %v188 = vpop.permute.xlu0 %187
    %vm189 = vcmp.eq.s32.totalorder %v40, %v188
    %vm190 = vmor %vm185, %vm189
    %v191 = vsel %vm190, 1, 0
    %v192 = vcvt.s32.f32 %v191
    %v193 = vpack.c.bf16 %v192, %v192
    %v258 = vunpack.c.l.b16 %v41
    %v259 = vunpack.c.l.b16 %v42
    %v260 = vunpack.c.l.b16 %v43
    %v261 = vunpack.c.l.b16 %v44
    %v262 = vunpack.c.l.b16 %v45
    %v263 = vunpack.c.l.b16 %v46
    %v264 = vunpack.c.l.b16 %v47
    %v265 = vunpack.c.l.b16 %v48
    %v266 = vunpack.c.l.b16 %v49
    %v267 = vunpack.c.l.b16 %v50
    %v268 = vunpack.c.l.b16 %v51
    %v269 = vunpack.c.l.b16 %v52
    %v270 = vunpack.c.l.b16 %v53
    %v271 = vunpack.c.l.b16 %v54
    %v272 = vunpack.c.l.b16 %v55
    %v273 = vunpack.c.l.b16 %v56
    %v274 = vunpack.c.l.b16 %v57
    %v275 = vunpack.c.l.b16 %v58
    %v276 = vunpack.c.l.b16 %v59
    %v277 = vunpack.c.l.b16 %v60
    %v278 = vunpack.c.l.b16 %v61
    %v279 = vunpack.c.l.b16 %v62
    %v280 = vunpack.c.l.b16 %v63
    %v281 = vunpack.c.l.b16 %v64
    %v282 = vunpack.c.l.b16 %v65
    %v283 = vunpack.c.l.b16 %v66
    %v284 = vunpack.c.l.b16 %v67
    %v285 = vunpack.c.l.b16 %v68
    %v286 = vunpack.c.l.b16 %v69
    %v287 = vunpack.c.l.b16 %v70
    %v288 = vunpack.c.l.b16 %v71
    %v289 = vunpack.c.l.b16 %v72
    %v290 = vunpack.c.l.b16 %v73
    %v291 = vunpack.c.l.b16 %v74
    %v292 = vunpack.c.l.b16 %v75
    %v293 = vunpack.c.l.b16 %v76
    %v294 = vunpack.c.l.b16 %v77
    %v295 = vunpack.c.l.b16 %v78
    %v296 = vunpack.c.l.b16 %v79
    %v297 = vunpack.c.l.b16 %v80
    %v298 = vunpack.c.l.b16 %v81
    %v299 = vunpack.c.l.b16 %v82
    %v300 = vunpack.c.l.b16 %v83
    %v301 = vunpack.c.l.b16 %v84
    %v302 = vunpack.c.l.b16 %v85
    %v303 = vunpack.c.l.b16 %v86
    %v304 = vunpack.c.l.b16 %v87
    %v305 = vunpack.c.l.b16 %v88
    %v306 = vunpack.c.l.b16 %v89
    %v307 = vunpack.c.l.b16 %v90
    %v308 = vunpack.c.l.b16 %v91
    %v309 = vunpack.c.l.b16 %v92
    %v310 = vunpack.c.l.b16 %v93
    %v311 = vunpack.c.l.b16 %v94
    %v312 = vunpack.c.l.b16 %v95
    %v313 = vunpack.c.l.b16 %v96
    %v314 = vunpack.c.l.b16 %v97
    %v315 = vunpack.c.l.b16 %v98
    %v316 = vunpack.c.l.b16 %v99
    %v317 = vunpack.c.l.b16 %v100
    %v318 = vunpack.c.l.b16 %v101
    %v319 = vunpack.c.l.b16 %v102
    %v320 = vunpack.c.l.b16 %v103
    %v321 = vunpack.c.l.b16 %v104
    %v322 = vpack.c.b16 %v259, %v258
    %v323 = vpack.c.b16 %v261, %v260
    %v324 = vpack.c.b16 %v263, %v262
    %v325 = vpack.c.b16 %v265, %v264
    %v326 = vpack.c.b16 %v267, %v266
    %v327 = vpack.c.b16 %v269, %v268
    %v328 = vpack.c.b16 %v271, %v270
    %v329 = vpack.c.b16 %v273, %v272
    %v330 = vpack.c.b16 %v275, %v274
    %v331 = vpack.c.b16 %v277, %v276
    %v332 = vpack.c.b16 %v279, %v278
    %v333 = vpack.c.b16 %v281, %v280
    %v334 = vpack.c.b16 %v283, %v282
    %v335 = vpack.c.b16 %v285, %v284
    %v336 = vpack.c.b16 %v287, %v286
    %v337 = vpack.c.b16 %v289, %v288
    %v338 = vpack.c.b16 %v291, %v290
    %v339 = vpack.c.b16 %v293, %v292
    %v340 = vpack.c.b16 %v295, %v294
    %v341 = vpack.c.b16 %v297, %v296
    %v342 = vpack.c.b16 %v299, %v298
    %v343 = vpack.c.b16 %v301, %v300
    %v344 = vpack.c.b16 %v303, %v302
    %v345 = vpack.c.b16 %v305, %v304
    %v346 = vpack.c.b16 %v307, %v306
    %v347 = vpack.c.b16 %v309, %v308
    %v348 = vpack.c.b16 %v311, %v310
    %v349 = vpack.c.b16 %v313, %v312
    %v350 = vpack.c.b16 %v315, %v314
    %v351 = vpack.c.b16 %v317, %v316
    %v352 = vpack.c.b16 %v319, %v318
    %v353 = vpack.c.b16 %v321, %v320
    %386 = vmatprep.subr.bf16.mxu0 0
    %387 = vmatpush1.bf16.msra.mxu0 %v322
    %388 = vmatprep.subr.bf16.mxu0 0
    %389 = vmatpush1.bf16.msra.mxu0 %v323
    %390 = vmatprep.subr.bf16.mxu0 0
    %391 = vmatpush1.bf16.msra.mxu0 %v324
    %392 = vmatprep.subr.bf16.mxu0 0
    %393 = vmatpush1.bf16.msra.mxu0 %v325
    %394 = vmatprep.subr.bf16.mxu0 0
    %395 = vmatpush1.bf16.msra.mxu0 %v326
    %396 = vmatprep.subr.bf16.mxu0 0
    %397 = vmatpush1.bf16.msra.mxu0 %v327
    %398 = vmatprep.subr.bf16.mxu0 0
    %399 = vmatpush1.bf16.msra.mxu0 %v328
    %400 = vmatprep.subr.bf16.mxu0 0
    %401 = vmatpush1.bf16.msra.mxu0 %v329
    %402 = vmatprep.subr.bf16.mxu0 0
    %403 = vmatpush1.bf16.msra.mxu0 %v330
    %404 = vmatprep.subr.bf16.mxu0 0
    %405 = vmatpush1.bf16.msra.mxu0 %v331
    %406 = vmatprep.subr.bf16.mxu0 0
    %407 = vmatpush1.bf16.msra.mxu0 %v332
    %408 = vmatprep.subr.bf16.mxu0 0
    %409 = vmatpush1.bf16.msra.mxu0 %v333
    %410 = vmatprep.subr.bf16.mxu0 0
    %411 = vmatpush1.bf16.msra.mxu0 %v334
    %412 = vmatprep.subr.bf16.mxu0 0
    %413 = vmatpush1.bf16.msra.mxu0 %v335
    %414 = vmatprep.subr.bf16.mxu0 0
    %415 = vmatpush1.bf16.msra.mxu0 %v336
    %416 = vmatprep.subr.bf16.mxu0 0
    %417 = vmatpush1.bf16.msra.mxu0 %v337
    %418 = vmatprep.mubr.bf16.mxu0 %v149
    %419 = vmatmul.mubr.bf16.gmra.mrb[0].mxu0 %v127
    %v420 = vpop.f32.mrb[0].mxu0
    %v421 = vadd.f32 0.0, %v420
    %v422 = vpop.f32.mrb[0].mxu0
    %v423 = vpop.f32.mrb[0].mxu0
    %v424 = vpop.f32.mrb[0].mxu0
    %425 = vdwg.mxu0
    %426 = vmatprep.subr.bf16.mxu0 0
    %427 = vmatpush1.bf16.msra.mxu0 %v338
    %428 = vmatprep.subr.bf16.mxu0 0
    %429 = vmatpush1.bf16.msra.mxu0 %v339
    %430 = vmatprep.subr.bf16.mxu0 0
    %431 = vmatpush1.bf16.msra.mxu0 %v340
    %432 = vmatprep.subr.bf16.mxu0 0
    %433 = vmatpush1.bf16.msra.mxu0 %v341
    %434 = vmatprep.subr.bf16.mxu0 0
    %435 = vmatpush1.bf16.msra.mxu0 %v342
    %436 = vmatprep.subr.bf16.mxu0 0
    %437 = vmatpush1.bf16.msra.mxu0 %v343
    %438 = vmatprep.subr.bf16.mxu0 0
    %439 = vmatpush1.bf16.msra.mxu0 %v344
    %440 = vmatprep.subr.bf16.mxu0 0
    %441 = vmatpush1.bf16.msra.mxu0 %v345
    %442 = vmatprep.subr.bf16.mxu0 0
    %443 = vmatpush1.bf16.msra.mxu0 %v346
    %444 = vmatprep.subr.bf16.mxu0 0
    %445 = vmatpush1.bf16.msra.mxu0 %v347
    %446 = vmatprep.subr.bf16.mxu0 0
    %447 = vmatpush1.bf16.msra.mxu0 %v348
    %448 = vmatprep.subr.bf16.mxu0 0
    %449 = vmatpush1.bf16.msra.mxu0 %v349
    %450 = vmatprep.subr.bf16.mxu0 0
    %451 = vmatpush1.bf16.msra.mxu0 %v350
    %452 = vmatprep.subr.bf16.mxu0 0
    %453 = vmatpush1.bf16.msra.mxu0 %v351
    %454 = vmatprep.subr.bf16.mxu0 0
    %455 = vmatpush1.bf16.msra.mxu0 %v352
    %456 = vmatprep.subr.bf16.mxu0 0
    %457 = vmatpush1.bf16.msra.mxu0 %v353
    %458 = vmatprep.mubr.bf16.mxu0 %v193
    %459 = vmatmul.mubr.bf16.gmra.mrb[0].mxu0 %v171
    %v460 = vpop.f32.mrb[0].mxu0
    %v461 = vadd.f32 %v421, %v460
    %v462 = vpop.f32.mrb[0].mxu0
    %v463 = vpop.f32.mrb[0].mxu0
    %v464 = vpop.f32.mrb[0].mxu0
    %465 = vdwg.mxu0
    %466 = vst [vmem:[#allocation7] sm:$0xff] %v461
    // Predicated region
    $region18: #{tpu_custom_call.1} parent=1 // pred_check
      _
    $region19: #{tpu_custom_call.1} parent=1 // pred_check_branch
      %468 = sbr.rel (0) target = $region21
    $region20: #{tpu_custom_call.1} parent=1 // pred_region
      %s470 = ssub.s32 128, 128
      %471 = vsyncadd [#allocation4], %s470
      %s473 = sshll.u32 [#allocation7], 4
      %s474 = int_to_ptr.vmem [resolvable:$true] %s473
      %476 = dma.vmem_to_hbm [thread:$0]  %s474, 128, %s2, [#allocation4]
    $region21: #{tpu_custom_call.1} parent=1 // pred_fallthru
      _
    // Predicated region
    $region22: #{tpu_custom_call.1} parent=1 // pred_check
      _
    $region23: #{tpu_custom_call.1} parent=1 // pred_check_branch
      %478 = sbr.rel (0) target = $region25
    $region24: #{tpu_custom_call.1} parent=1 // pred_region
      %479 = dma.done [#allocation4], 128
    $region25: #{tpu_custom_call.1} parent=1 // pred_fallthru
      _
    %480 = vsyncpa [#allocation3], 1
    %481 = vsyncpa [#allocation6], 1
    %482 = vsyncpa [#allocation4], 1

</llo_original>
